<compile_context>
chip_gen: v7x
topology: tpu7x:2x2x1
jax: 0.10.0
libtpu: 0.0.40
codegen_flags: <defaults>
</compile_context>

<pallas_src>
from functools import partial

import jax
import jax.numpy as jnp
from jax.experimental import pallas as pl
from jax.experimental.pallas import tpu as pltpu


# ----------------------------------------------------------------------------
# Tiling / compiler-parameter helpers
# ----------------------------------------------------------------------------
_VMEM_LIMIT = 48 * 1024 * 1024   # v7x: 64 MiB physical VMEM -> 48 MiB budget


def _lane_tile(M, cap=512):
    """Tile for the lane (last) dim: a multiple of 128, <= cap, and — when M
    allows it — chosen so the grid has >= 2 steps (keeps both v7x TensorCores
    busy; costs nothing on single-TC v5e/v6e)."""
    if M <= 128:
        return M                                   # full-dim block (allowed)
    half = pl.cdiv(pl.cdiv(M, 2), 128) * 128       # >= 2 grid steps
    return max(128, min(cap, half))


def _cparams():
    return pltpu.CompilerParams(
        dimension_semantics=("parallel",),
        vmem_limit_bytes=_VMEM_LIMIT,
    )


# ----------------------------------------------------------------------------
# Pallas kernels.  All operate on channels-first 2-D slabs:
#   sublanes = channels / im2col-K, lanes = flattened (n, ho, wo) positions.
# ----------------------------------------------------------------------------
def _bn_relu_kernel(x_ref, s_ref, b_ref, o_ref):
    # y = relu(x * scale + shift); (C, 1) params broadcast along lanes.
    o_ref[...] = jnp.maximum(x_ref[...] * s_ref[...] + b_ref[...],
                             0.0).astype(o_ref.dtype)


def _conv_bn_relu_kernel(w_ref, a_ref, b_ref, o_ref):
    # conv1 as MXU matmul; bn2 scale is pre-folded into w, so the epilogue is
    # only +shift and relu (rides idle VPU slots while the MXU works).
    acc = jnp.dot(w_ref[...], a_ref[...], preferred_element_type=jnp.float32)
    o_ref[...] = jnp.maximum(acc + b_ref[...], 0.0).astype(o_ref.dtype)


def _conv_residual_kernel(w_ref, a_ref, r_ref, o_ref):
    # conv2 as MXU matmul with the residual add fused in-kernel.
    acc = jnp.dot(w_ref[...], a_ref[...], preferred_element_type=jnp.float32)
    o_ref[...] = (acc + r_ref[...]).astype(o_ref.dtype)


def _conv_shortcut_residual_kernel(w_ref, a_ref, ws_ref, hs_ref, o_ref):
    # conv2 + 1x1 shortcut conv + residual add in one kernel; the tiny
    # shortcut matmul hides entirely under the conv2 MXU work.
    acc = jnp.dot(w_ref[...], a_ref[...], preferred_element_type=jnp.float32)
    acc = acc + jnp.dot(ws_ref[...], hs_ref[...],
                        preferred_element_type=jnp.float32)
    o_ref[...] = acc.astype(o_ref.dtype)


# ----------------------------------------------------------------------------
# pallas_call wrappers
# ----------------------------------------------------------------------------
def bn_relu(x2d, scale, shift):
    """relu(x * scale + shift). x2d: (C, M) f32, scale/shift: (C,). -> (C, M) bf16."""
    C, M = x2d.shape
    tm = _lane_tile(M)
    return pl.pallas_call(
        _bn_relu_kernel,
        out_shape=jax.ShapeDtypeStruct((C, M), jnp.bfloat16),
        grid=(pl.cdiv(M, tm),),
        in_specs=[
            pl.BlockSpec((C, tm), lambda i: (0, i)),
            pl.BlockSpec((C, 1), lambda i: (0, 0)),
            pl.BlockSpec((C, 1), lambda i: (0, 0)),
        ],
        out_specs=pl.BlockSpec((C, tm), lambda i: (0, i)),
        compiler_params=_cparams(),
    )(x2d, scale.reshape(C, 1), shift.reshape(C, 1))


def conv_bn_relu(w, a, shift):
    """relu(w @ a + shift). w: (Cout, K) bf16 (bn2 scale folded in),
    a: (K, M) bf16 im2col patches, shift: (Cout,) f32. -> (Cout, M) bf16."""
    Cout, K = w.shape
    M = a.shape[1]
    tm = _lane_tile(M)
    return pl.pallas_call(
        _conv_bn_relu_kernel,
        out_shape=jax.ShapeDtypeStruct((Cout, M), jnp.bfloat16),
        grid=(pl.cdiv(M, tm),),
        in_specs=[
            pl.BlockSpec((Cout, K), lambda i: (0, 0)),   # weight stays resident
            pl.BlockSpec((K, tm), lambda i: (0, i)),
            pl.BlockSpec((Cout, 1), lambda i: (0, 0)),
        ],
        out_specs=pl.BlockSpec((Cout, tm), lambda i: (0, i)),
        compiler_params=_cparams(),
    )(w, a, shift.reshape(Cout, 1))


def conv_residual(w, a, res):
    """w @ a + res. w: (Cout, K) bf16, a: (K, M) bf16, res: (Cout, M) f32."""
    Cout, K = w.shape
    M = a.shape[1]
    tm = _lane_tile(M)
    return pl.pallas_call(
        _conv_residual_kernel,
        out_shape=jax.ShapeDtypeStruct((Cout, M), jnp.float32),
        grid=(pl.cdiv(M, tm),),
        in_specs=[
            pl.BlockSpec((Cout, K), lambda i: (0, 0)),
            pl.BlockSpec((K, tm), lambda i: (0, i)),
            pl.BlockSpec((Cout, tm), lambda i: (0, i)),
        ],
        out_specs=pl.BlockSpec((Cout, tm), lambda i: (0, i)),
        compiler_params=_cparams(),
    )(w, a, res)


def conv_shortcut_residual(w, a, ws, hs):
    """w @ a + ws @ hs. w: (Cout, K) bf16, a: (K, M) bf16,
    ws: (Cout, Cin) bf16 1x1-shortcut weight, hs: (Cin, M) bf16 (strided h)."""
    Cout, K = w.shape
    Cin = ws.shape[1]
    M = a.shape[1]
    tm = _lane_tile(M)
    return pl.pallas_call(
        _conv_shortcut_residual_kernel,
        out_shape=jax.ShapeDtypeStruct((Cout, M), jnp.float32),
        grid=(pl.cdiv(M, tm),),
        in_specs=[
            pl.BlockSpec((Cout, K), lambda i: (0, 0)),
            pl.BlockSpec((K, tm), lambda i: (0, i)),
            pl.BlockSpec((Cout, Cin), lambda i: (0, 0)),
            pl.BlockSpec((Cin, tm), lambda i: (0, i)),
        ],
        out_specs=pl.BlockSpec((Cout, tm), lambda i: (0, i)),
        compiler_params=_cparams(),
    )(w, a, ws, hs)


# ----------------------------------------------------------------------------
# Glue: im2col and weight preparation (plain JAX, channels-first layout)
# ----------------------------------------------------------------------------
def im2col_3x3(h_c, stride):
    """h_c: (C, N, H, W) -> (9*C, N*Ho*Wo) patches for a 3x3 / pad 1 conv.
    Row order (kh, kw, ci); column order (n, ho, wo)."""
    C, N, H, W = h_c.shape
    hp = jnp.pad(h_c, ((0, 0), (0, 0), (1, 1), (1, 1)))
    Ho = (H + 2 - 3) // stride + 1
    Wo = (W + 2 - 3) // stride + 1
    taps = [hp[:, :, kh:kh + stride * Ho:stride, kw:kw + stride * Wo:stride]
            for kh in range(3) for kw in range(3)]
    pat = jnp.concatenate(taps, axis=0)                # (9*C, N, Ho, Wo)
    return pat.reshape(9 * C, N * Ho * Wo), (Ho, Wo)


def conv3x3_weight_matrix(w_oihw):
    """(Cout, Cin, 3, 3) -> (Cout, 9*Cin) with column order (kh, kw, ci)."""
    cout, cin = w_oihw.shape[:2]
    return jnp.transpose(w_oihw, (0, 2, 3, 1)).reshape(cout, 9 * cin)


def _prep_block(p):
    """Torch-layout params -> kernel-ready matrices (bf16 MXU operands; the
    bn2 scale is folded into the conv1 weight so only shift+relu remain)."""
    cout, cin = p["conv1_w"].shape[:2]
    w1 = conv3x3_weight_matrix(p["conv1_w"]) * p["bn2_scale"][:, None]
    kp = {
        "bn1_scale": p["bn1_scale"].astype(jnp.float32),
        "bn1_shift": p["bn1_shift"].astype(jnp.float32),
        "w1": w1.astype(jnp.bfloat16),
        "bn2_shift": p["bn2_shift"].astype(jnp.float32),
        "w2": conv3x3_weight_matrix(p["conv2_w"]).astype(jnp.bfloat16),
    }
    if "convs_w" in p:
        kp["ws"] = p["convs_w"].reshape(cout, cin).astype(jnp.bfloat16)
    return kp


# ----------------------------------------------------------------------------
# BasicBlock / NetworkBlock forward (Pallas-backed)
# ----------------------------------------------------------------------------
def basic_block_forward(x_c, p, stride):
    """One BasicBlock. x_c: (Cin, N, H, W) f32 channels-first.
    Mirrors wrn.BasicBlock.forward (eval mode, dropRate=0)."""
    Cin, N, H, W = x_c.shape
    kp = _prep_block(p)
    Cout = kp["w1"].shape[0]
    equal = "ws" not in kp        # PyTorch: equalInOut <=> no convShortcut

    # (1) h = relu(bn1(x)) — fused elementwise kernel, bf16 output.
    h = bn_relu(x_c.reshape(Cin, N * H * W), kp["bn1_scale"], kp["bn1_shift"])
    h_c = h.reshape(Cin, N, H, W)

    # (2) conv1 (3x3, stride, pad 1) + bn2 + relu — one fused matmul kernel.
    pat1, (Ho, Wo) = im2col_3x3(h_c, stride)
    M = N * Ho * Wo
    o = conv_bn_relu(kp["w1"], pat1, kp["bn2_shift"])          # (Cout, M) bf16

    # (3) conv2 (3x3, stride 1, pad 1) + residual (+ 1x1 shortcut) — one kernel.
    pat2, _ = im2col_3x3(o.reshape(Cout, N, Ho, Wo), 1)
    if equal:
        # equalInOut implies stride == 1 in WRN configs, so x is added as-is
        # (same assumption as the PyTorch module).
        out = conv_residual(kp["w2"], pat2, x_c.reshape(Cout, M))
    else:
        hs = h_c[:, :, ::stride, ::stride].reshape(Cin, M)     # strided h, bf16
        out = conv_shortcut_residual(kp["w2"], pat2, kp["ws"], hs)
    return out.reshape(Cout, N, Ho, Wo)


@partial(jax.jit, static_argnums=(2,))
def network_block_forward(x_nchw, params, stride):
    """NetworkBlock.forward: sequential BasicBlocks (stride only on the first).
    Input/output are NCHW like the PyTorch module."""
    x_c = jnp.transpose(x_nchw, (1, 0, 2, 3)).astype(jnp.float32)  # NCHW->CNHW
    for i, bp in enumerate(params):
        x_c = basic_block_forward(x_c, bp, stride if i == 0 else 1)
    return jnp.transpose(x_c, (1, 0, 2, 3))                        # CNHW->NCHW


# ----------------------------------------------------------------------------
# Deterministic parameter init (shapes per BasicBlock.__init__)
# ----------------------------------------------------------------------------
def init_basic_block(key, cin, cout, eps=1e-5):
    ks = jax.random.split(key, 11)

    def conv_w(k, co, ci, ksize):
        n = ksize * ksize * co
        return jax.random.normal(k, (co, ci, ksize, ksize), jnp.float32) * jnp.sqrt(2.0 / n)

    g1 = 1.0 + 0.1 * jax.random.normal(ks[0], (cin,), jnp.float32)
    b1 = 0.1 * jax.random.normal(ks[1], (cin,), jnp.float32)
    m1 = 0.1 * jax.random.normal(ks[2], (cin,), jnp.float32)
    v1 = 1.0 + 0.1 * jax.random.uniform(ks[3], (cin,), jnp.float32)
    g2 = 1.0 + 0.1 * jax.random.normal(ks[4], (cout,), jnp.float32)
    b2 = 0.1 * jax.random.normal(ks[5], (cout,), jnp.float32)
    m2 = 0.1 * jax.random.normal(ks[6], (cout,), jnp.float32)
    v2 = 1.0 + 0.1 * jax.random.uniform(ks[7], (cout,), jnp.float32)

    s1 = g1 / jnp.sqrt(v1 + eps)
    s2 = g2 / jnp.sqrt(v2 + eps)
    p = {
        "bn1_scale": s1, "bn1_shift": b1 - m1 * s1,
        "bn2_scale": s2, "bn2_shift": b2 - m2 * s2,
        "conv1_w": conv_w(ks[8], cout, cin, 3),
        "conv2_w": conv_w(ks[9], cout, cout, 3),
    }
    if cin != cout:
        p["convs_w"] = conv_w(ks[10], cout, cin, 1)   # 1x1 shortcut conv
    return p


def init_network_block(key, nb_layers, in_planes, out_planes):
    keys = jax.random.split(key, nb_layers)
    return [init_basic_block(keys[i], in_planes if i == 0 else out_planes, out_planes)
            for i in range(nb_layers)]


# ----------------------------------------------------------------------------
# Pure-JAX f32 reference (for correctness check)
# ----------------------------------------------------------------------------
def _ref_conv(x, w, stride, pad):
    return jax.lax.conv_general_dilated(
        x, w, (stride, stride), ((pad, pad), (pad, pad)),
        dimension_numbers=("NCHW", "OIHW", "NCHW"))


def ref_basic_block(x, p, stride):
    equal = "convs_w" not in p
    s1 = p["bn1_scale"][None, :, None, None]
    b1 = p["bn1_shift"][None, :, None, None]
    h = jnp.maximum(x * s1 + b1, 0.0)
    res = x if equal else _ref_conv(h, p["convs_w"], stride, 0)
    o = _ref_conv(h, p["conv1_w"], stride, 1)
    s2 = p["bn2_scale"][None, :, None, None]
    b2 = p["bn2_shift"][None, :, None, None]
    o = jnp.maximum(o * s2 + b2, 0.0)
    o = _ref_conv(o, p["conv2_w"], 1, 1)
    return res + o


def ref_network_block(x, params, stride):
    for i, p in enumerate(params):
        x = ref_basic_block(x, p, stride if i == 0 else 1)
    return x


# ----------------------------------------------------------------------------
if __name__ == "__main__":
    key = jax.random.PRNGKey(0)
    kx, kp = jax.random.split(key)

    # NetworkBlock(nb_layers=2, in_planes=4, out_planes=8, block=BasicBlock,
    #              stride=2, dropRate=0.0); input NCHW = (2, 4, 16, 16)
    N, Cin, H, W = 2, 4, 16, 16
    Cout, nb_layers, stride = 8, 2, 2

    x = jax.random.normal(kx, (N, Cin, H, W), jnp.float32)
    params = init_network_block(kp, nb_layers, Cin, Cout)

    out = network_block_forward(x, params, stride)
    out = jax.block_until_ready(out)
    assert out.shape == (N, Cout, H // stride, W // stride), out.shape

    ref = ref_network_block(x, params, stride)
    scale = float(jnp.max(jnp.abs(ref)))
    err = float(jnp.max(jnp.abs(out - ref)))
    # bf16 MXU operands with f32 accumulation vs. an f32 reference.
    assert err <= 0.05 * max(scale, 1.0), f"max abs err {err} (ref scale {scale})"

    print("KERNEL_OK")
</pallas_src>

<mosaic_0001>
module attributes {stable_mosaic.version = 11 : i64} {
  func.func @_bn_relu_kernel(%arg0: i32, %arg1: memref<4x256xf32, #tpu.memory_space<vmem>>, %arg2: memref<4x1xf32, #tpu.memory_space<vmem>>, %arg3: memref<4x1xf32, #tpu.memory_space<vmem>>, %arg4: memref<4x256xbf16, #tpu.memory_space<vmem>>) attributes {dimension_semantics = [#tpu.dimension_semantics<parallel>], iteration_bounds = array<i64: 2>, scalar_prefetch = 0 : i64, scratch_operands = 0 : i64, tpu.core_type = #tpu.core_type<tc>, window_params = [{transform_indices = @transform_0, window_bounds = array<i64: 4, 256>}, {pipeline_mode = #tpu.pipeline_mode<synchronous>, transform_indices = @transform_1, window_bounds = array<i64: 4, 1>}, {pipeline_mode = #tpu.pipeline_mode<synchronous>, transform_indices = @transform_2, window_bounds = array<i64: 4, 1>}, {transform_indices = @transform_3, window_bounds = array<i64: 4, 256>}]} {
    %c0 = arith.constant 0 : index
    %c0_0 = arith.constant 0 : index
    %0 = vector.load %arg1[%c0, %c0_0] : memref<4x256xf32, #tpu.memory_space<vmem>>, vector<4x256xf32>
    %c0_1 = arith.constant 0 : index
    %c0_2 = arith.constant 0 : index
    %1 = vector.load %arg2[%c0_1, %c0_2] : memref<4x1xf32, #tpu.memory_space<vmem>>, vector<4x1xf32>
    %2 = vector.broadcast %1 : vector<4x1xf32> to vector<4x256xf32>
    %3 = arith.mulf %0, %2 : vector<4x256xf32>
    %c0_3 = arith.constant 0 : index
    %c0_4 = arith.constant 0 : index
    %4 = vector.load %arg3[%c0_3, %c0_4] : memref<4x1xf32, #tpu.memory_space<vmem>>, vector<4x1xf32>
    %5 = vector.broadcast %4 : vector<4x1xf32> to vector<4x256xf32>
    %6 = arith.addf %3, %5 : vector<4x256xf32>
    %cst = arith.constant 0.000000e+00 : f32
    %7 = vector.broadcast %cst : f32 to vector<4x256xf32>
    %8 = arith.maximumf %6, %7 : vector<4x256xf32>
    %9 = arith.truncf %8 : vector<4x256xf32> to vector<4x256xbf16>
    %c0_5 = arith.constant 0 : index
    %c0_6 = arith.constant 0 : index
    %10 = vector.load %arg4[%c0_5, %c0_6] : memref<4x256xbf16, #tpu.memory_space<vmem>>, vector<4x256xbf16>
    tpu.vector_store %arg4[%c0_5, %c0_6], %9 {strides = array<i32>} : memref<4x256xbf16, #tpu.memory_space<vmem>>, vector<4x256xbf16>,
    return
  }
  func.func @transform_0(%arg0: i32) -> (i32, i32) {
    %c0_i32 = arith.constant 0 : i32
    %c0_i32_0 = arith.constant 0 : i32
    return %c0_i32, %arg0 : i32, i32
  }
  func.func @transform_1(%arg0: i32) -> (i32, i32) {
    %c0_i32 = arith.constant 0 : i32
    %c0_i32_0 = arith.constant 0 : i32
    %c0_i32_1 = arith.constant 0 : i32
    return %c0_i32, %c0_i32_0 : i32, i32
  }
  func.func @transform_2(%arg0: i32) -> (i32, i32) {
    %c0_i32 = arith.constant 0 : i32
    %c0_i32_0 = arith.constant 0 : i32
    %c0_i32_1 = arith.constant 0 : i32
    return %c0_i32, %c0_i32_0 : i32, i32
  }
  func.func @transform_3(%arg0: i32) -> (i32, i32) {
    %c0_i32 = arith.constant 0 : i32
    %c0_i32_0 = arith.constant 0 : i32
    return %c0_i32, %arg0 : i32, i32
  }
}

module attributes {stable_mosaic.version = 11 : i64} {
  func.func @_conv_bn_relu_kernel(%arg0: i32, %arg1: memref<8x36xbf16, #tpu.memory_space<vmem>>, %arg2: memref<36x128xbf16, #tpu.memory_space<vmem>>, %arg3: memref<8x1xf32, #tpu.memory_space<vmem>>, %arg4: memref<8x128xbf16, #tpu.memory_space<vmem>>) attributes {dimension_semantics = [#tpu.dimension_semantics<parallel>], iteration_bounds = array<i64: 1>, scalar_prefetch = 0 : i64, scratch_operands = 0 : i64, tpu.core_type = #tpu.core_type<tc>, window_params = [{pipeline_mode = #tpu.pipeline_mode<synchronous>, transform_indices = @transform_0, window_bounds = array<i64: 8, 36>}, {transform_indices = @transform_1, window_bounds = array<i64: 36, 128>}, {pipeline_mode = #tpu.pipeline_mode<synchronous>, transform_indices = @transform_2, window_bounds = array<i64: 8, 1>}, {transform_indices = @transform_3, window_bounds = array<i64: 8, 128>}]} {
    %c0 = arith.constant 0 : index
    %c0_0 = arith.constant 0 : index
    %0 = vector.load %arg1[%c0, %c0_0] : memref<8x36xbf16, #tpu.memory_space<vmem>>, vector<8x36xbf16>
    %c0_1 = arith.constant 0 : index
    %c0_2 = arith.constant 0 : index
    %1 = vector.load %arg2[%c0_1, %c0_2] : memref<36x128xbf16, #tpu.memory_space<vmem>>, vector<36x128xbf16>
    %cst = arith.constant dense<0.000000e+00> : vector<8x128xf32>
    %2 = tpu.matmul %0, %1, %cst {dimension_numbers = #tpu.dot_dimension_numbers<[1], [0], [0], [1], [0, 0, 1, 1], [], []>} : vector<8x36xbf16>, vector<36x128xbf16>, vector<8x128xf32> -> vector<8x128xf32>
    %c0_3 = arith.constant 0 : index
    %c0_4 = arith.constant 0 : index
    %3 = vector.load %arg3[%c0_3, %c0_4] : memref<8x1xf32, #tpu.memory_space<vmem>>, vector<8x1xf32>
    %4 = vector.broadcast %3 : vector<8x1xf32> to vector<8x128xf32>
    %5 = arith.addf %2, %4 : vector<8x128xf32>
    %cst_5 = arith.constant 0.000000e+00 : f32
    %6 = vector.broadcast %cst_5 : f32 to vector<8x128xf32>
    %7 = arith.maximumf %5, %6 : vector<8x128xf32>
    %8 = arith.truncf %7 : vector<8x128xf32> to vector<8x128xbf16>
    %c0_6 = arith.constant 0 : index
    %c0_7 = arith.constant 0 : index
    %9 = vector.load %arg4[%c0_6, %c0_7] : memref<8x128xbf16, #tpu.memory_space<vmem>>, vector<8x128xbf16>
    tpu.vector_store %arg4[%c0_6, %c0_7], %8 {strides = array<i32>} : memref<8x128xbf16, #tpu.memory_space<vmem>>, vector<8x128xbf16>,
    return
  }
  func.func @transform_0(%arg0: i32) -> (i32, i32) {
    %c0_i32 = arith.constant 0 : i32
    %c0_i32_0 = arith.constant 0 : i32
    %c0_i32_1 = arith.constant 0 : i32
    return %c0_i32, %c0_i32_0 : i32, i32
  }
  func.func @transform_1(%arg0: i32) -> (i32, i32) {
    %c0_i32 = arith.constant 0 : i32
    %c0_i32_0 = arith.constant 0 : i32
    return %c0_i32, %arg0 : i32, i32
  }
  func.func @transform_2(%arg0: i32) -> (i32, i32) {
    %c0_i32 = arith.constant 0 : i32
    %c0_i32_0 = arith.constant 0 : i32
    %c0_i32_1 = arith.constant 0 : i32
    return %c0_i32, %c0_i32_0 : i32, i32
  }
  func.func @transform_3(%arg0: i32) -> (i32, i32) {
    %c0_i32 = arith.constant 0 : i32
    %c0_i32_0 = arith.constant 0 : i32
    return %c0_i32, %arg0 : i32, i32
  }
}

module attributes {stable_mosaic.version = 11 : i64} {
  func.func @_conv_shortcut_residual_kernel(%arg0: i32, %arg1: memref<8x72xbf16, #tpu.memory_space<vmem>>, %arg2: memref<72x128xbf16, #tpu.memory_space<vmem>>, %arg3: memref<8x4xbf16, #tpu.memory_space<vmem>>, %arg4: memref<4x128xbf16, #tpu.memory_space<vmem>>, %arg5: memref<8x128xf32, #tpu.memory_space<vmem>>) attributes {dimension_semantics = [#tpu.dimension_semantics<parallel>], iteration_bounds = array<i64: 1>, scalar_prefetch = 0 : i64, scratch_operands = 0 : i64, tpu.core_type = #tpu.core_type<tc>, window_params = [{pipeline_mode = #tpu.pipeline_mode<synchronous>, transform_indices = @transform_0, window_bounds = array<i64: 8, 72>}, {transform_indices = @transform_1, window_bounds = array<i64: 72, 128>}, {pipeline_mode = #tpu.pipeline_mode<synchronous>, transform_indices = @transform_2, window_bounds = array<i64: 8, 4>}, {transform_indices = @transform_3, window_bounds = array<i64: 4, 128>}, {transform_indices = @transform_4, window_bounds = array<i64: 8, 128>}]} {
    %c0 = arith.constant 0 : index
    %c0_0 = arith.constant 0 : index
    %0 = vector.load %arg1[%c0, %c0_0] : memref<8x72xbf16, #tpu.memory_space<vmem>>, vector<8x72xbf16>
    %c0_1 = arith.constant 0 : index
    %c0_2 = arith.constant 0 : index
    %1 = vector.load %arg2[%c0_1, %c0_2] : memref<72x128xbf16, #tpu.memory_space<vmem>>, vector<72x128xbf16>
    %cst = arith.constant dense<0.000000e+00> : vector<8x128xf32>
    %2 = tpu.matmul %0, %1, %cst {dimension_numbers = #tpu.dot_dimension_numbers<[1], [0], [0], [1], [0, 0, 1, 1], [], []>} : vector<8x72xbf16>, vector<72x128xbf16>, vector<8x128xf32> -> vector<8x128xf32>
    %c0_3 = arith.constant 0 : index
    %c0_4 = arith.constant 0 : index
    %3 = vector.load %arg3[%c0_3, %c0_4] : memref<8x4xbf16, #tpu.memory_space<vmem>>, vector<8x4xbf16>
    %c0_5 = arith.constant 0 : index
    %c0_6 = arith.constant 0 : index
    %4 = vector.load %arg4[%c0_5, %c0_6] : memref<4x128xbf16, #tpu.memory_space<vmem>>, vector<4x128xbf16>
    %cst_7 = arith.constant dense<0.000000e+00> : vector<8x128xf32>
    %5 = tpu.matmul %3, %4, %cst_7 {dimension_numbers = #tpu.dot_dimension_numbers<[1], [0], [0], [1], [0, 0, 1, 1], [], []>} : vector<8x4xbf16>, vector<4x128xbf16>, vector<8x128xf32> -> vector<8x128xf32>
    %6 = arith.addf %2, %5 : vector<8x128xf32>
    %c0_8 = arith.constant 0 : index
    %c0_9 = arith.constant 0 : index
    %7 = vector.load %arg5[%c0_8, %c0_9] : memref<8x128xf32, #tpu.memory_space<vmem>>, vector<8x128xf32>
    tpu.vector_store %arg5[%c0_8, %c0_9], %6 {strides = array<i32>} : memref<8x128xf32, #tpu.memory_space<vmem>>, vector<8x128xf32>,
    return
  }
  func.func @transform_0(%arg0: i32) -> (i32, i32) {
    %c0_i32 = arith.constant 0 : i32
    %c0_i32_0 = arith.constant 0 : i32
    %c0_i32_1 = arith.constant 0 : i32
    return %c0_i32, %c0_i32_0 : i32, i32
  }
  func.func @transform_1(%arg0: i32) -> (i32, i32) {
    %c0_i32 = arith.constant 0 : i32
    %c0_i32_0 = arith.constant 0 : i32
    return %c0_i32, %arg0 : i32, i32
  }
  func.func @transform_2(%arg0: i32) -> (i32, i32) {
    %c0_i32 = arith.constant 0 : i32
    %c0_i32_0 = arith.constant 0 : i32
    %c0_i32_1 = arith.constant 0 : i32
    return %c0_i32, %c0_i32_0 : i32, i32
  }
  func.func @transform_3(%arg0: i32) -> (i32, i32) {
    %c0_i32 = arith.constant 0 : i32
    %c0_i32_0 = arith.constant 0 : i32
    return %c0_i32, %arg0 : i32, i32
  }
  func.func @transform_4(%arg0: i32) -> (i32, i32) {
    %c0_i32 = arith.constant 0 : i32
    %c0_i32_0 = arith.constant 0 : i32
    return %c0_i32, %arg0 : i32, i32
  }
}

module attributes {stable_mosaic.version = 11 : i64} {
  func.func @_bn_relu_kernel(%arg0: i32, %arg1: memref<8x128xf32, #tpu.memory_space<vmem>>, %arg2: memref<8x1xf32, #tpu.memory_space<vmem>>, %arg3: memref<8x1xf32, #tpu.memory_space<vmem>>, %arg4: memref<8x128xbf16, #tpu.memory_space<vmem>>) attributes {dimension_semantics = [#tpu.dimension_semantics<parallel>], iteration_bounds = array<i64: 1>, scalar_prefetch = 0 : i64, scratch_operands = 0 : i64, tpu.core_type = #tpu.core_type<tc>, window_params = [{transform_indices = @transform_0, window_bounds = array<i64: 8, 128>}, {pipeline_mode = #tpu.pipeline_mode<synchronous>, transform_indices = @transform_1, window_bounds = array<i64: 8, 1>}, {pipeline_mode = #tpu.pipeline_mode<synchronous>, transform_indices = @transform_2, window_bounds = array<i64: 8, 1>}, {transform_indices = @transform_3, window_bounds = array<i64: 8, 128>}]} {
    %c0 = arith.constant 0 : index
    %c0_0 = arith.constant 0 : index
    %0 = vector.load %arg1[%c0, %c0_0] : memref<8x128xf32, #tpu.memory_space<vmem>>, vector<8x128xf32>
    %c0_1 = arith.constant 0 : index
    %c0_2 = arith.constant 0 : index
    %1 = vector.load %arg2[%c0_1, %c0_2] : memref<8x1xf32, #tpu.memory_space<vmem>>, vector<8x1xf32>
    %2 = vector.broadcast %1 : vector<8x1xf32> to vector<8x128xf32>
    %3 = arith.mulf %0, %2 : vector<8x128xf32>
    %c0_3 = arith.constant 0 : index
    %c0_4 = arith.constant 0 : index
    %4 = vector.load %arg3[%c0_3, %c0_4] : memref<8x1xf32, #tpu.memory_space<vmem>>, vector<8x1xf32>
    %5 = vector.broadcast %4 : vector<8x1xf32> to vector<8x128xf32>
    %6 = arith.addf %3, %5 : vector<8x128xf32>
    %cst = arith.constant 0.000000e+00 : f32
    %7 = vector.broadcast %cst : f32 to vector<8x128xf32>
    %8 = arith.maximumf %6, %7 : vector<8x128xf32>
    %9 = arith.truncf %8 : vector<8x128xf32> to vector<8x128xbf16>
    %c0_5 = arith.constant 0 : index
    %c0_6 = arith.constant 0 : index
    %10 = vector.load %arg4[%c0_5, %c0_6] : memref<8x128xbf16, #tpu.memory_space<vmem>>, vector<8x128xbf16>
    tpu.vector_store %arg4[%c0_5, %c0_6], %9 {strides = array<i32>} : memref<8x128xbf16, #tpu.memory_space<vmem>>, vector<8x128xbf16>,
    return
  }
  func.func @transform_0(%arg0: i32) -> (i32, i32) {
    %c0_i32 = arith.constant 0 : i32
    %c0_i32_0 = arith.constant 0 : i32
    return %c0_i32, %arg0 : i32, i32
  }
  func.func @transform_1(%arg0: i32) -> (i32, i32) {
    %c0_i32 = arith.constant 0 : i32
    %c0_i32_0 = arith.constant 0 : i32
    %c0_i32_1 = arith.constant 0 : i32
    return %c0_i32, %c0_i32_0 : i32, i32
  }
  func.func @transform_2(%arg0: i32) -> (i32, i32) {
    %c0_i32 = arith.constant 0 : i32
    %c0_i32_0 = arith.constant 0 : i32
    %c0_i32_1 = arith.constant 0 : i32
    return %c0_i32, %c0_i32_0 : i32, i32
  }
  func.func @transform_3(%arg0: i32) -> (i32, i32) {
    %c0_i32 = arith.constant 0 : i32
    %c0_i32_0 = arith.constant 0 : i32
    return %c0_i32, %arg0 : i32, i32
  }
}

module attributes {stable_mosaic.version = 11 : i64} {
  func.func @_conv_bn_relu_kernel(%arg0: i32, %arg1: memref<8x72xbf16, #tpu.memory_space<vmem>>, %arg2: memref<72x128xbf16, #tpu.memory_space<vmem>>, %arg3: memref<8x1xf32, #tpu.memory_space<vmem>>, %arg4: memref<8x128xbf16, #tpu.memory_space<vmem>>) attributes {dimension_semantics = [#tpu.dimension_semantics<parallel>], iteration_bounds = array<i64: 1>, scalar_prefetch = 0 : i64, scratch_operands = 0 : i64, tpu.core_type = #tpu.core_type<tc>, window_params = [{pipeline_mode = #tpu.pipeline_mode<synchronous>, transform_indices = @transform_0, window_bounds = array<i64: 8, 72>}, {transform_indices = @transform_1, window_bounds = array<i64: 72, 128>}, {pipeline_mode = #tpu.pipeline_mode<synchronous>, transform_indices = @transform_2, window_bounds = array<i64: 8, 1>}, {transform_indices = @transform_3, window_bounds = array<i64: 8, 128>}]} {
    %c0 = arith.constant 0 : index
    %c0_0 = arith.constant 0 : index
    %0 = vector.load %arg1[%c0, %c0_0] : memref<8x72xbf16, #tpu.memory_space<vmem>>, vector<8x72xbf16>
    %c0_1 = arith.constant 0 : index
    %c0_2 = arith.constant 0 : index
    %1 = vector.load %arg2[%c0_1, %c0_2] : memref<72x128xbf16, #tpu.memory_space<vmem>>, vector<72x128xbf16>
    %cst = arith.constant dense<0.000000e+00> : vector<8x128xf32>
    %2 = tpu.matmul %0, %1, %cst {dimension_numbers = #tpu.dot_dimension_numbers<[1], [0], [0], [1], [0, 0, 1, 1], [], []>} : vector<8x72xbf16>, vector<72x128xbf16>, vector<8x128xf32> -> vector<8x128xf32>
    %c0_3 = arith.constant 0 : index
    %c0_4 = arith.constant 0 : index
    %3 = vector.load %arg3[%c0_3, %c0_4] : memref<8x1xf32, #tpu.memory_space<vmem>>, vector<8x1xf32>
    %4 = vector.broadcast %3 : vector<8x1xf32> to vector<8x128xf32>
    %5 = arith.addf %2, %4 : vector<8x128xf32>
    %cst_5 = arith.constant 0.000000e+00 : f32
    %6 = vector.broadcast %cst_5 : f32 to vector<8x128xf32>
    %7 = arith.maximumf %5, %6 : vector<8x128xf32>
    %8 = arith.truncf %7 : vector<8x128xf32> to vector<8x128xbf16>
    %c0_6 = arith.constant 0 : index
    %c0_7 = arith.constant 0 : index
    %9 = vector.load %arg4[%c0_6, %c0_7] : memref<8x128xbf16, #tpu.memory_space<vmem>>, vector<8x128xbf16>
    tpu.vector_store %arg4[%c0_6, %c0_7], %8 {strides = array<i32>} : memref<8x128xbf16, #tpu.memory_space<vmem>>, vector<8x128xbf16>,
    return
  }
  func.func @transform_0(%arg0: i32) -> (i32, i32) {
    %c0_i32 = arith.constant 0 : i32
    %c0_i32_0 = arith.constant 0 : i32
    %c0_i32_1 = arith.constant 0 : i32
    return %c0_i32, %c0_i32_0 : i32, i32
  }
  func.func @transform_1(%arg0: i32) -> (i32, i32) {
    %c0_i32 = arith.constant 0 : i32
    %c0_i32_0 = arith.constant 0 : i32
    return %c0_i32, %arg0 : i32, i32
  }
  func.func @transform_2(%arg0: i32) -> (i32, i32) {
    %c0_i32 = arith.constant 0 : i32
    %c0_i32_0 = arith.constant 0 : i32
    %c0_i32_1 = arith.constant 0 : i32
    return %c0_i32, %c0_i32_0 : i32, i32
  }
  func.func @transform_3(%arg0: i32) -> (i32, i32) {
    %c0_i32 = arith.constant 0 : i32
    %c0_i32_0 = arith.constant 0 : i32
    return %c0_i32, %arg0 : i32, i32
  }
}

module attributes {stable_mosaic.version = 11 : i64} {
  func.func @_conv_residual_kernel(%arg0: i32, %arg1: memref<8x72xbf16, #tpu.memory_space<vmem>>, %arg2: memref<72x128xbf16, #tpu.memory_space<vmem>>, %arg3: memref<8x128xf32, #tpu.memory_space<vmem>>, %arg4: memref<8x128xf32, #tpu.memory_space<vmem>>) attributes {dimension_semantics = [#tpu.dimension_semantics<parallel>], iteration_bounds = array<i64: 1>, scalar_prefetch = 0 : i64, scratch_operands = 0 : i64, tpu.core_type = #tpu.core_type<tc>, window_params = [{pipeline_mode = #tpu.pipeline_mode<synchronous>, transform_indices = @transform_0, window_bounds = array<i64: 8, 72>}, {transform_indices = @transform_1, window_bounds = array<i64: 72, 128>}, {transform_indices = @transform_2, window_bounds = array<i64: 8, 128>}, {transform_indices = @transform_3, window_bounds = array<i64: 8, 128>}]} {
    %c0 = arith.constant 0 : index
    %c0_0 = arith.constant 0 : index
    %0 = vector.load %arg1[%c0, %c0_0] : memref<8x72xbf16, #tpu.memory_space<vmem>>, vector<8x72xbf16>
    %c0_1 = arith.constant 0 : index
    %c0_2 = arith.constant 0 : index
    %1 = vector.load %arg2[%c0_1, %c0_2] : memref<72x128xbf16, #tpu.memory_space<vmem>>, vector<72x128xbf16>
    %cst = arith.constant dense<0.000000e+00> : vector<8x128xf32>
    %2 = tpu.matmul %0, %1, %cst {dimension_numbers = #tpu.dot_dimension_numbers<[1], [0], [0], [1], [0, 0, 1, 1], [], []>} : vector<8x72xbf16>, vector<72x128xbf16>, vector<8x128xf32> -> vector<8x128xf32>
    %c0_3 = arith.constant 0 : index
    %c0_4 = arith.constant 0 : index
    %3 = vector.load %arg3[%c0_3, %c0_4] : memref<8x128xf32, #tpu.memory_space<vmem>>, vector<8x128xf32>
    %4 = arith.addf %2, %3 : vector<8x128xf32>
    %c0_5 = arith.constant 0 : index
    %c0_6 = arith.constant 0 : index
    %5 = vector.load %arg4[%c0_5, %c0_6] : memref<8x128xf32, #tpu.memory_space<vmem>>, vector<8x128xf32>
    tpu.vector_store %arg4[%c0_5, %c0_6], %4 {strides = array<i32>} : memref<8x128xf32, #tpu.memory_space<vmem>>, vector<8x128xf32>,
    return
  }
  func.func @transform_0(%arg0: i32) -> (i32, i32) {
    %c0_i32 = arith.constant 0 : i32
    %c0_i32_0 = arith.constant 0 : i32
    %c0_i32_1 = arith.constant 0 : i32
    return %c0_i32, %c0_i32_0 : i32, i32
  }
  func.func @transform_1(%arg0: i32) -> (i32, i32) {
    %c0_i32 = arith.constant 0 : i32
    %c0_i32_0 = arith.constant 0 : i32
    return %c0_i32, %arg0 : i32, i32
  }
  func.func @transform_2(%arg0: i32) -> (i32, i32) {
    %c0_i32 = arith.constant 0 : i32
    %c0_i32_0 = arith.constant 0 : i32
    return %c0_i32, %arg0 : i32, i32
  }
  func.func @transform_3(%arg0: i32) -> (i32, i32) {
    %c0_i32 = arith.constant 0 : i32
    %c0_i32_0 = arith.constant 0 : i32
    return %c0_i32, %arg0 : i32, i32
  }
}

</mosaic_0001>

<llo_original>
// kernel: network_block_forward.6
$region0: #{network_block_forward.6}
  #allocation0 [shape = 'u32[]', space=smem, size = 0x4, offset = 0x4, fixed_abs, tag = 'smem constant byte address 0x4 - core index']
  #allocation1 [shape = 'u32[144,128]{1,0:T(1,128)}', space=vmem, size = 0x12000, scoped, tag = 'internal scratch']
  %s0 = inlined_call_operand.vmem [shape: f32[4,512], index: 0, kind: input, shape index: {}]
  %s1 = inlined_call_operand.vmem [shape: f32[4,1], index: 1, kind: input, shape index: {}]
  %s2 = inlined_call_operand.vmem [shape: f32[4,1], index: 2, kind: input, shape index: {}]
  %s3 = inlined_call_operand.vmem [shape: bf16[4,512], index: 3, kind: output, shape index: {}]
  %s4 = sld [smem:[#allocation0]]
  $region45: #{network_block_forward.6} parent=0
    _
  %s6 = ssub.s32 1, %s4
  %s7 = scalar_select 0, %s6, %s4
  loop: start=0, step=1, limit=4
  $region2: #{network_block_forward.6} parent=0 // loop_pre_header
    _
  $region3: #{network_block_forward.6} parent=0 // loop_header
    %s9 = sphi 0, %s13
    %p10 = scmp.ge.s32.totalorder %s9, 4
    %s19 = sphi 0, %s21
    %s22 = sphi 0, %s19
    %s23 = sphi 0, %s22
    %s39 = sphi 0, %s23
    %s43 = sphi 0, %s43
    %s45 = sphi 0, %s43
    %s46 = sphi 0, %s45
    %s60 = sphi 0, %s46
    %s64 = sphi 0, %s64
    %s66 = sphi 0, %s64
    %s67 = sphi 0, %s66
    %s81 = sphi 0, %s67
    %s87 = sphi 0, %s89
    %s90 = sphi 0, %s87
    %s91 = sphi 0, %s90
    %s107 = sphi 0, %s91
  $region4: #{network_block_forward.6} parent=0 // loop_header_branch
    %12 = sbr.rel (%p10) target = $region8
  $region5: #{network_block_forward.6} parent=0 // loop_body
    %s14 = ssub.s32 %s9, 1
    %s15 = ssub.s32 %s9, 2
    %s16 = sadd.s32 %s9, 1
    %s17 = ssub.s32 %s9, %s16
    %p18 = scmp.eq.s32.totalorder %s17, 0
    %s20 = sadd.s32 %s19, 1
    %s21 = scalar_select %p18, %s19, %s20
    %p24 = pneg %p18
    %p25 = scmp.eq.s32.totalorder %s9, 1
    %p26 = por %p24, %p25
    %p27 = scmp.ne.s32.totalorder %s19, %s22
    %p28 = scmp.eq.s32.totalorder %s9, 0
    %p29 = por %p27, %p28
    %p30 = scmp.ne.s32.totalorder %s19, %s22
    %p31 = scmp.eq.s32.totalorder %s14, 1
    %p32 = por %p30, %p31
    %p33 = scmp.ne.s32.totalorder %s22, %s23
    %p34 = scmp.eq.s32.totalorder %s14, 0
    %p35 = por %p33, %p34
    %p36 = scmp.ne.s32.totalorder %s22, %s23
    %p37 = scmp.eq.s32.totalorder %s15, 1
    %p38 = por %p36, %p37
    %p40 = scmp.ne.s32.totalorder %s23, %s39
    %p41 = scmp.eq.s32.totalorder %s15, 0
    %p42 = por %p40, %p41
    %s44 = sadd.s32 %s43, 1
    %p47 = scmp.eq.s32.totalorder %s9, 1
    %p48 = scmp.ne.s32.totalorder %s43, %s45
    %p49 = scmp.eq.s32.totalorder %s9, 0
    %p50 = por %p48, %p49
    %p51 = scmp.ne.s32.totalorder %s43, %s45
    %p52 = scmp.eq.s32.totalorder %s14, 1
    %p53 = por %p51, %p52
    %p54 = scmp.ne.s32.totalorder %s45, %s46
    %p55 = scmp.eq.s32.totalorder %s14, 0
    %p56 = por %p54, %p55
    %p57 = scmp.ne.s32.totalorder %s45, %s46
    %p58 = scmp.eq.s32.totalorder %s15, 1
    %p59 = por %p57, %p58
    %p61 = scmp.ne.s32.totalorder %s46, %s60
    %p62 = scmp.eq.s32.totalorder %s15, 0
    %p63 = por %p61, %p62
    %s65 = sadd.s32 %s64, 1
    %p68 = scmp.eq.s32.totalorder %s9, 1
    %p69 = scmp.ne.s32.totalorder %s64, %s66
    %p70 = scmp.eq.s32.totalorder %s9, 0
    %p71 = por %p69, %p70
    %p72 = scmp.ne.s32.totalorder %s64, %s66
    %p73 = scmp.eq.s32.totalorder %s14, 1
    %p74 = por %p72, %p73
    %p75 = scmp.ne.s32.totalorder %s66, %s67
    %p76 = scmp.eq.s32.totalorder %s14, 0
    %p77 = por %p75, %p76
    %p78 = scmp.ne.s32.totalorder %s66, %s67
    %p79 = scmp.eq.s32.totalorder %s15, 1
    %p80 = por %p78, %p79
    %p82 = scmp.ne.s32.totalorder %s67, %s81
    %p83 = scmp.eq.s32.totalorder %s15, 0
    %p84 = por %p82, %p83
    %s85 = ssub.s32 %s9, %s16
    %p86 = scmp.eq.s32.totalorder %s85, 0
    %s88 = sadd.s32 %s87, 1
    %s89 = scalar_select %p86, %s87, %s88
    %p92 = pneg %p86
    %p93 = scmp.eq.s32.totalorder %s9, 1
    %p94 = por %p92, %p93
    %p95 = scmp.ne.s32.totalorder %s87, %s90
    %p96 = scmp.eq.s32.totalorder %s9, 0
    %p97 = por %p95, %p96
    %p98 = scmp.ne.s32.totalorder %s87, %s90
    %p99 = scmp.eq.s32.totalorder %s14, 1
    %p100 = por %p98, %p99
    %p101 = scmp.ne.s32.totalorder %s90, %s91
    %p102 = scmp.eq.s32.totalorder %s14, 0
    %p103 = por %p101, %p102
    %p104 = scmp.ne.s32.totalorder %s90, %s91
    %p105 = scmp.eq.s32.totalorder %s15, 1
    %p106 = por %p104, %p105
    %p108 = scmp.ne.s32.totalorder %s91, %s107
    %p109 = scmp.eq.s32.totalorder %s15, 0
    %p110 = por %p108, %p109
    %p111 = scmp.le.s32.totalorder 1, %s9
    %p112 = scmp.lt.s32.totalorder %s9, 3
    %p113 = pnand %p111, %p112
    %p114 = pneg %p113
    // Predicated region
    $region9: #{network_block_forward.6} parent=5 // pred_check
      _
    $region10: #{network_block_forward.6} parent=5 // pred_check_branch
      %116 = sbr.rel (%p113) target = $region12
    $region11: #{network_block_forward.6} parent=5 // pred_region
      %s117 = ssub.s32 %s9, 1
      // Predicated region
      $region13: #{network_block_forward.6} parent=11 // pred_check
        %p118 = pneg %p56
      $region14: #{network_block_forward.6} parent=11 // pred_check_branch
        %120 = sbr.rel (%p118) target = $region16
      $region15: #{network_block_forward.6} parent=11 // pred_region
        _
      $region16: #{network_block_forward.6} parent=11 // pred_fallthru
        _
      // Predicated region
      $region17: #{network_block_forward.6} parent=11 // pred_check
        %p121 = pneg %p77
      $region18: #{network_block_forward.6} parent=11 // pred_check_branch
        %123 = sbr.rel (%p121) target = $region20
      $region19: #{network_block_forward.6} parent=11 // pred_region
        _
      $region20: #{network_block_forward.6} parent=11 // pred_fallthru
        _
    $region12: #{network_block_forward.6} parent=5 // pred_fallthru
      _
    %p124 = scmp.lt.s32.totalorder %s9, 2
    // Predicated region
    $region21: #{network_block_forward.6} parent=5 // pred_check
      %p125 = pneg %p124
    $region22: #{network_block_forward.6} parent=5 // pred_check_branch
      %127 = sbr.rel (%p125) target = $region24
    $region23: #{network_block_forward.6} parent=5 // pred_region
      // Predicated region
      $region25: #{network_block_forward.6} parent=23 // pred_check
        %p128 = pneg %p29
      $region26: #{network_block_forward.6} parent=23 // pred_check_branch
        %130 = sbr.rel (%p128) target = $region28
      $region27: #{network_block_forward.6} parent=23 // pred_region
        %s131 = smul.u32 2, %s9
        %p132 = scmp.lt.s32.totalorder %s131, 3
        %s133 = scalar_select %p132, %s131, 3
        %s134 = smul.addr %s133, 4
        %s135 = scalar_lea.vmem %s0, %s134
        %s136 = smul.u32 2, %s9
      $region28: #{network_block_forward.6} parent=23 // pred_fallthru
        _
    $region24: #{network_block_forward.6} parent=5 // pred_fallthru
      _
    %p137 = scmp.le.s32.totalorder 1, %s9
    %p138 = scmp.lt.s32.totalorder %s9, 3
    %p139 = pnand %p137, %p138
    %p140 = pneg %p139
    // Predicated region
    $region29: #{network_block_forward.6} parent=5 // pred_check
      _
    $region30: #{network_block_forward.6} parent=5 // pred_check_branch
      %142 = sbr.rel (%p139) target = $region32
    $region31: #{network_block_forward.6} parent=5 // pred_region
      %s143 = ssub.s32 %s9, 1
      %s144 = smul.u32 2, %s14
      %p145 = scmp.lt.s32.totalorder %s144, 3
      %s146 = scalar_select %p145, %s144, 3
      %s147 = smul.addr %s146, 4
      %s148 = scalar_lea.vmem %s0, %s147
      %p149 = pneg %p35
      %p150 = pneg %p32
      %p151 = pneg %p56
      %p152 = pneg %p53
      %p153 = pneg %p77
      %p154 = pneg %p74
      %p155 = pneg %p103
      %p156 = pneg %p100
      %s157 = smul.u32 2, %s14
      %p158 = scmp.lt.s32.totalorder %s157, 3
      %s159 = scalar_select %p158, %s157, 3
      %s160 = smul.addr %s159, 2
      %s161 = scalar_lea.vmem %s3, %s160
      %s162 = smul.u32 2, %s14
      %p163 = scmp.lt.s32.totalorder %s162, 3
      %s164 = scalar_select %p163, %s162, 3
      %s165 = smul.addr %s164, 4
      %s166 = scalar_lea.vmem %s0, %s165
      %s167 = smul.u32 2, %s14
      %s168 = smul.u32 2, %s14
      %p169 = scmp.lt.s32.totalorder %s168, 3
      %s170 = scalar_select %p169, %s168, 3
      %s171 = smul.addr %s170, 2
      %s172 = scalar_lea.vmem %s3, %s171
      %s173 = smul.u32 2, %s14
      %v174 = vld [vmem:[%s166] sm:$0xff]
      %v175 = vld [vmem:[%s1] sm:$0xf]
      %177 = vset.pattern.permute.xlu0 0
      %178 = vperm.xlu0 %177, %v175
      %v179 = vpop.permute.xlu0 %178
      %v181 = vunpack.c.l.s4 839922192
      %v182 = vunpack.c.0.s8 %v181
      %v183 = vlaneseq
      %v184 = vshrl.u32 %v183, 7
      %v185 = vsub.s32 %v182, %v184
      %v186 = vrot.slane %v179, %v185
      %v188 = vmul.f32 %v174, %v186
      %v189 = vld [vmem:[%s2] sm:$0xf]
      %191 = vset.pattern.permute.xlu0 0
      %192 = vperm.xlu0 %191, %v189
      %v193 = vpop.permute.xlu0 %192
      %v195 = vunpack.c.l.s4 839922192
      %v196 = vunpack.c.0.s8 %v195
      %v197 = vlaneseq
      %v198 = vshrl.u32 %v197, 7
      %v199 = vsub.s32 %v196, %v198
      %v200 = vrot.slane %v193, %v199
      %v202 = vadd.f32 %v188, %v200
      %v203 = vmax.f32 %v202, 0.0
      %v205 = vcombine.high %v203, %v203
      %v207 = vpack.c.bf16 %v203, %v203
      %v208 = vpack.c.bf16 %v205, %v205
      %v211 = vcombine.low %v207, %v208
      %v213 = vunpack.c.l.s4 1983009808
      %v214 = vunpack.c.0.s8 %v213
      %v215 = vlaneseq
      %v216 = vshrl.u32 %v215, 7
      %v217 = vsub.s32 %v214, %v216
      %v218 = vrot.slane %v211, %v217
      %220 = vst [vmem:[%s172] sm:$0xf] %v218
      %s221 = smul.u32 2, %s14
      %p222 = scmp.lt.s32.totalorder %s221, 3
      %s223 = scalar_select %p222, %s221, 3
      %s224 = smul.addr %s223, 2
      %s225 = scalar_lea.vmem %s3, %s224
      // Predicated region
      $region33: #{network_block_forward.6} parent=31 // pred_check
        %p226 = pneg %p100
      $region34: #{network_block_forward.6} parent=31 // pred_check_branch
        %228 = sbr.rel (%p226) target = $region36
      $region35: #{network_block_forward.6} parent=31 // pred_region
        %s229 = smul.u32 2, %s14
      $region36: #{network_block_forward.6} parent=31 // pred_fallthru
        _
    $region32: #{network_block_forward.6} parent=5 // pred_fallthru
      _
    %p230 = scmp.le.s32.totalorder 2, %s9
    // Predicated region
    $region37: #{network_block_forward.6} parent=5 // pred_check
      %p231 = pneg %p230
    $region38: #{network_block_forward.6} parent=5 // pred_check_branch
      %233 = sbr.rel (%p231) target = $region40
    $region39: #{network_block_forward.6} parent=5 // pred_region
      %s234 = ssub.s32 %s9, 2
      // Predicated region
      $region41: #{network_block_forward.6} parent=39 // pred_check
        %p235 = pneg %p106
      $region42: #{network_block_forward.6} parent=39 // pred_check_branch
        %237 = sbr.rel (%p235) target = $region44
      $region43: #{network_block_forward.6} parent=39 // pred_region
        %s238 = smul.u32 2, %s15
        %p239 = scmp.lt.s32.totalorder %s238, 3
        %s240 = scalar_select %p239, %s238, 3
        %s241 = smul.addr %s240, 2
        %s242 = scalar_lea.vmem %s3, %s241
      $region44: #{network_block_forward.6} parent=39 // pred_fallthru
        _
    $region40: #{network_block_forward.6} parent=5 // pred_fallthru
      _
  $region6: #{network_block_forward.6} parent=0 // loop_footer
    %s13 = sadd.s32 1, %s9
  $region7: #{network_block_forward.6} parent=0 // loop_footer_branch
    %8 = sbr.rel target = $region3
  $region8: #{network_block_forward.6} parent=0 // loop_exit
    _

// kernel: network_block_forward.7
$region0: #{network_block_forward.7}
  #allocation0 [shape = 'u32[]', space=smem, size = 0x4, offset = 0x4, fixed_abs, tag = 'smem constant byte address 0x4 - core index']
  #allocation1 [shape = 'u32[144,128]{1,0:T(1,128)}', space=vmem, size = 0x12000, scoped, tag = 'internal scratch']
  %s0 = inlined_call_operand.vmem [shape: bf16[8,36], index: 0, kind: input, shape index: {}]
  %s1 = inlined_call_operand.vmem [shape: bf16[36,128], index: 1, kind: input, shape index: {}]
  %s2 = inlined_call_operand.vmem [shape: f32[8,1], index: 2, kind: input, shape index: {}]
  %s3 = inlined_call_operand.vmem [shape: bf16[8,128], index: 3, kind: output, shape index: {}]
  %s4 = sld [smem:[#allocation0]]
  $region22: #{network_block_forward.7} parent=0
    _
  %s6 = ssub.s32 1, %s4
  %s7 = scalar_select 0, %s6, %s4
  // Predicated region
  $region2: #{network_block_forward.7} parent=0 // pred_check
    _
  $region3: #{network_block_forward.7} parent=0 // pred_check_branch
    %9 = sbr.rel (0) target = $region5
  $region4: #{network_block_forward.7} parent=0 // pred_region
    _
  $region5: #{network_block_forward.7} parent=0 // pred_fallthru
    _
  // Predicated region
  $region6: #{network_block_forward.7} parent=0 // pred_check
    _
  $region7: #{network_block_forward.7} parent=0 // pred_check_branch
    %11 = sbr.rel (0) target = $region9
  $region8: #{network_block_forward.7} parent=0 // pred_region
    _
  $region9: #{network_block_forward.7} parent=0 // pred_fallthru
    _
  // Predicated region
  $region10: #{network_block_forward.7} parent=0 // pred_check
    _
  $region11: #{network_block_forward.7} parent=0 // pred_check_branch
    %13 = sbr.rel (0) target = $region13
  $region12: #{network_block_forward.7} parent=0 // pred_region
    _
  $region13: #{network_block_forward.7} parent=0 // pred_fallthru
    _
  %v15 = vld [vmem:[%s0] sm:$0xf]
  %v16 = vld [vmem:[%s1] sm:$0xf]
  %v17 = vld [vmem:[%s1 + $0x4] sm:$0xf]
  %v18 = vld [vmem:[%s1 + $0x8] sm:$0xf]
  %v19 = vld [vmem:[%s1 + $0xc] sm:$0xf]
  %v20 = vld [vmem:[%s1 + $0x10] sm:$0x3]
  %v21 = vld [vmem:[%s2] sm:$0xff]
  %23 = vset.pattern.permute.xlu0 0
  %24 = vperm.xlu0 %23, %v21
  %v25 = vpop.permute.xlu0 %24
  %v32 = vunpack.c.l.b16 %v16
  %v33 = vunpack.c.l.b16 %v17
  %v34 = vunpack.c.l.b16 %v18
  %v35 = vunpack.c.l.b16 %v19
  %v36 = vunpack.c.l.b16 %v20
  %v37 = vpack.c.b16 %v33, %v32
  %v38 = vpack.c.b16 %v35, %v34
  %v39 = vpack.c.b16 %v36, %v36
  %vm42 = vcmask 293888
  %v44 = vsel %vm42, %v15, 0
  %vm46 = vcmask 1041408
  %v48 = vsel %vm46, %v39, 0
  %50 = vmatprep.subr.bf16.mxu0 0
  %51 = vmatpush1.bf16.msra.mxu0 %v37
  %52 = vmatprep.subr.bf16.mxu0 0
  %53 = vmatpush1.bf16.msra.mxu0 %v38
  %54 = vmatprep.subr.bf16.mxu0 0
  %55 = vmatpush1.bf16.msra.mxu0 %v48
  %56 = vmatprep.subr.bf16.mxu0 0
  %57 = vmatpush1.bf16.msra.mxu0 0
  %58 = vmatprep.subr.bf16.mxu0 0
  %59 = vmatpush1.bf16.msra.mxu0 0
  %60 = vmatprep.subr.bf16.mxu0 0
  %61 = vmatpush1.bf16.msra.mxu0 0
  %62 = vmatprep.subr.bf16.mxu0 0
  %63 = vmatpush1.bf16.msra.mxu0 0
  %64 = vmatprep.subr.bf16.mxu0 0
  %65 = vmatpush1.bf16.msra.mxu0 0
  %66 = vmatprep.subr.bf16.mxu0 0
  %67 = vmatpush1.bf16.msra.mxu0 0
  %68 = vmatprep.subr.bf16.mxu0 0
  %69 = vmatpush1.bf16.msra.mxu0 0
  %70 = vmatprep.subr.bf16.mxu0 0
  %71 = vmatpush1.bf16.msra.mxu0 0
  %72 = vmatprep.subr.bf16.mxu0 0
  %73 = vmatpush1.bf16.msra.mxu0 0
  %74 = vmatprep.subr.bf16.mxu0 0
  %75 = vmatpush1.bf16.msra.mxu0 0
  %76 = vmatprep.subr.bf16.mxu0 0
  %77 = vmatpush1.bf16.msra.mxu0 0
  %78 = vmatprep.subr.bf16.mxu0 0
  %79 = vmatpush1.bf16.msra.mxu0 0
  %80 = vmatprep.subr.bf16.mxu0 0
  %81 = vmatpush1.bf16.msra.mxu0 0
  %82 = vmatprep.mubr.bf16.mxu0 0
  %83 = vmatmul.mubr.bf16.gmra.mrb[0].mxu0 %v44
  %v84 = vpop.f32.mrb[0].mxu0
  %v85 = vadd.f32 %v25, %v84
  %v86 = vpop.f32.mrb[0].mxu0
  %v87 = vpop.f32.mrb[0].mxu0
  %v88 = vpop.f32.mrb[0].mxu0
  %89 = vdwg.mxu0
  %v90 = vmax.f32 %v85, 0.0
  %v91 = vpack.c.bf16 %v90, %v90
  %92 = vst [vmem:[%s3] sm:$0xf] %v91
  // Predicated region
  $region14: #{network_block_forward.7} parent=0 // pred_check
    _
  $region15: #{network_block_forward.7} parent=0 // pred_check_branch
    %94 = sbr.rel (0) target = $region17
  $region16: #{network_block_forward.7} parent=0 // pred_region
    _
  $region17: #{network_block_forward.7} parent=0 // pred_fallthru
    _
  // Predicated region
  $region18: #{network_block_forward.7} parent=0 // pred_check
    _
  $region19: #{network_block_forward.7} parent=0 // pred_check_branch
    %96 = sbr.rel (0) target = $region21
  $region20: #{network_block_forward.7} parent=0 // pred_region
    _
  $region21: #{network_block_forward.7} parent=0 // pred_fallthru
    _

// kernel: network_block_forward.9
$region0: #{network_block_forward.9}
  #allocation0 [shape = 'u32[]', space=smem, size = 0x4, offset = 0x4, fixed_abs, tag = 'smem constant byte address 0x4 - core index']
  #allocation1 [shape = 'u32[144,128]{1,0:T(1,128)}', space=vmem, size = 0x12000, scoped, tag = 'internal scratch']
  %s0 = inlined_call_operand.vmem [shape: f32[8,128], index: 0, kind: input, shape index: {}]
  %s1 = inlined_call_operand.vmem [shape: f32[8,1], index: 1, kind: input, shape index: {}]
  %s2 = inlined_call_operand.vmem [shape: f32[8,1], index: 2, kind: input, shape index: {}]
  %s3 = inlined_call_operand.vmem [shape: bf16[8,128], index: 3, kind: output, shape index: {}]
  %s4 = sld [smem:[#allocation0]]
  $region22: #{network_block_forward.9} parent=0
    _
  %s6 = ssub.s32 1, %s4
  %s7 = scalar_select 0, %s6, %s4
  // Predicated region
  $region2: #{network_block_forward.9} parent=0 // pred_check
    _
  $region3: #{network_block_forward.9} parent=0 // pred_check_branch
    %9 = sbr.rel (0) target = $region5
  $region4: #{network_block_forward.9} parent=0 // pred_region
    _
  $region5: #{network_block_forward.9} parent=0 // pred_fallthru
    _
  // Predicated region
  $region6: #{network_block_forward.9} parent=0 // pred_check
    _
  $region7: #{network_block_forward.9} parent=0 // pred_check_branch
    %11 = sbr.rel (0) target = $region9
  $region8: #{network_block_forward.9} parent=0 // pred_region
    _
  $region9: #{network_block_forward.9} parent=0 // pred_fallthru
    _
  // Predicated region
  $region10: #{network_block_forward.9} parent=0 // pred_check
    _
  $region11: #{network_block_forward.9} parent=0 // pred_check_branch
    %13 = sbr.rel (0) target = $region13
  $region12: #{network_block_forward.9} parent=0 // pred_region
    _
  $region13: #{network_block_forward.9} parent=0 // pred_fallthru
    _
  %v14 = vld [vmem:[%s0] sm:$0xff]
  %v15 = vld [vmem:[%s1] sm:$0xff]
  %17 = vset.pattern.permute.xlu0 0
  %18 = vperm.xlu0 %17, %v15
  %v19 = vpop.permute.xlu0 %18
  %v21 = vmul.f32 %v14, %v19
  %v22 = vld [vmem:[%s2] sm:$0xff]
  %24 = vset.pattern.permute.xlu0 0
  %25 = vperm.xlu0 %24, %v22
  %v26 = vpop.permute.xlu0 %25
  %v28 = vadd.f32 %v21, %v26
  %v29 = vmax.f32 %v28, 0.0
  %v30 = vpack.c.bf16 %v29, %v29
  %31 = vst [vmem:[%s3] sm:$0xf] %v30
  // Predicated region
  $region14: #{network_block_forward.9} parent=0 // pred_check
    _
  $region15: #{network_block_forward.9} parent=0 // pred_check_branch
    %33 = sbr.rel (0) target = $region17
  $region16: #{network_block_forward.9} parent=0 // pred_region
    _
  $region17: #{network_block_forward.9} parent=0 // pred_fallthru
    _
  // Predicated region
  $region18: #{network_block_forward.9} parent=0 // pred_check
    _
  $region19: #{network_block_forward.9} parent=0 // pred_check_branch
    %35 = sbr.rel (0) target = $region21
  $region20: #{network_block_forward.9} parent=0 // pred_region
    _
  $region21: #{network_block_forward.9} parent=0 // pred_fallthru
    _

// kernel: network_block_forward.8
$region0: #{network_block_forward.8}
  #allocation0 [shape = 'u32[]', space=smem, size = 0x4, offset = 0x4, fixed_abs, tag = 'smem constant byte address 0x4 - core index']
  #allocation1 [shape = 'u32[144,128]{1,0:T(1,128)}', space=vmem, size = 0x12000, scoped, tag = 'internal scratch']
  %s0 = inlined_call_operand.vmem [shape: bf16[8,72], index: 0, kind: input, shape index: {}]
  %s1 = inlined_call_operand.vmem [shape: bf16[72,128], index: 1, kind: input, shape index: {}]
  %s2 = inlined_call_operand.vmem [shape: bf16[8,4], index: 2, kind: input, shape index: {}]
  %s3 = inlined_call_operand.vmem [shape: bf16[4,128], index: 3, kind: input, shape index: {}]
  %s4 = inlined_call_operand.vmem [shape: f32[8,128], index: 4, kind: output, shape index: {}]
  %s5 = sld [smem:[#allocation0]]
  $region26: #{network_block_forward.8} parent=0
    _
  %s7 = ssub.s32 1, %s5
  %s8 = scalar_select 0, %s7, %s5
  // Predicated region
  $region2: #{network_block_forward.8} parent=0 // pred_check
    _
  $region3: #{network_block_forward.8} parent=0 // pred_check_branch
    %10 = sbr.rel (0) target = $region5
  $region4: #{network_block_forward.8} parent=0 // pred_region
    _
  $region5: #{network_block_forward.8} parent=0 // pred_fallthru
    _
  // Predicated region
  $region6: #{network_block_forward.8} parent=0 // pred_check
    _
  $region7: #{network_block_forward.8} parent=0 // pred_check_branch
    %12 = sbr.rel (0) target = $region9
  $region8: #{network_block_forward.8} parent=0 // pred_region
    _
  $region9: #{network_block_forward.8} parent=0 // pred_fallthru
    _
  // Predicated region
  $region10: #{network_block_forward.8} parent=0 // pred_check
    _
  $region11: #{network_block_forward.8} parent=0 // pred_check_branch
    %14 = sbr.rel (0) target = $region13
  $region12: #{network_block_forward.8} parent=0 // pred_region
    _
  $region13: #{network_block_forward.8} parent=0 // pred_fallthru
    _
  // Predicated region
  $region14: #{network_block_forward.8} parent=0 // pred_check
    _
  $region15: #{network_block_forward.8} parent=0 // pred_check_branch
    %16 = sbr.rel (0) target = $region17
  $region16: #{network_block_forward.8} parent=0 // pred_region
    _
  $region17: #{network_block_forward.8} parent=0 // pred_fallthru
    _
  %v18 = vld [vmem:[%s0] sm:$0xf]
  %v19 = vld [vmem:[%s1] sm:$0xf]
  %v20 = vld [vmem:[%s1 + $0x4] sm:$0xf]
  %v21 = vld [vmem:[%s1 + $0x8] sm:$0xf]
  %v22 = vld [vmem:[%s1 + $0xc] sm:$0xf]
  %v23 = vld [vmem:[%s1 + $0x10] sm:$0xf]
  %v24 = vld [vmem:[%s1 + $0x14] sm:$0xf]
  %v25 = vld [vmem:[%s1 + $0x18] sm:$0xf]
  %v26 = vld [vmem:[%s1 + $0x1c] sm:$0xf]
  %v27 = vld [vmem:[%s1 + $0x20] sm:$0xf]
  %v28 = vld [vmem:[%s2] sm:$0xf]
  %v29 = vld [vmem:[%s3] sm:$0x3]
  %vm30 = vcmask 31744
  %v32 = vsel %vm30, %v28, 0
  %vm34 = vcmask 1041408
  %v36 = vsel %vm34, %v29, 0
  %38 = vmatprep.subr.bf16.mxu0 0
  %39 = vmatpush1.bf16.msra.mxu0 %v36
  %40 = vmatprep.subr.bf16.mxu0 0
  %41 = vmatpush1.bf16.msra.mxu0 0
  %42 = vmatprep.subr.bf16.mxu0 0
  %43 = vmatpush1.bf16.msra.mxu0 0
  %44 = vmatprep.subr.bf16.mxu0 0
  %45 = vmatpush1.bf16.msra.mxu0 0
  %46 = vmatprep.subr.bf16.mxu0 0
  %47 = vmatpush1.bf16.msra.mxu0 0
  %48 = vmatprep.subr.bf16.mxu0 0
  %49 = vmatpush1.bf16.msra.mxu0 0
  %50 = vmatprep.subr.bf16.mxu0 0
  %51 = vmatpush1.bf16.msra.mxu0 0
  %52 = vmatprep.subr.bf16.mxu0 0
  %53 = vmatpush1.bf16.msra.mxu0 0
  %54 = vmatprep.subr.bf16.mxu0 0
  %55 = vmatpush1.bf16.msra.mxu0 0
  %56 = vmatprep.subr.bf16.mxu0 0
  %57 = vmatpush1.bf16.msra.mxu0 0
  %58 = vmatprep.subr.bf16.mxu0 0
  %59 = vmatpush1.bf16.msra.mxu0 0
  %60 = vmatprep.subr.bf16.mxu0 0
  %61 = vmatpush1.bf16.msra.mxu0 0
  %62 = vmatprep.subr.bf16.mxu0 0
  %63 = vmatpush1.bf16.msra.mxu0 0
  %64 = vmatprep.subr.bf16.mxu0 0
  %65 = vmatpush1.bf16.msra.mxu0 0
  %66 = vmatprep.subr.bf16.mxu0 0
  %67 = vmatpush1.bf16.msra.mxu0 0
  %68 = vmatprep.subr.bf16.mxu0 0
  %69 = vmatpush1.bf16.msra.mxu0 0
  %70 = vmatprep.mubr.bf16.mxu0 0
  %71 = vmatmul.mubr.bf16.gmra.mrb[0].mxu0 %v32
  %v72 = vpop.f32.mrb[0].mxu0
  %v73 = vadd.f32 0.0, %v72
  %v74 = vpop.f32.mrb[0].mxu0
  %v75 = vpop.f32.mrb[0].mxu0
  %v76 = vpop.f32.mrb[0].mxu0
  %77 = vdwg.mxu0
  %v87 = vunpack.c.l.b16 %v19
  %v88 = vunpack.c.l.b16 %v20
  %v89 = vunpack.c.l.b16 %v21
  %v90 = vunpack.c.l.b16 %v22
  %v91 = vunpack.c.l.b16 %v23
  %v92 = vunpack.c.l.b16 %v24
  %v93 = vunpack.c.l.b16 %v25
  %v94 = vunpack.c.l.b16 %v26
  %v95 = vunpack.c.l.b16 %v27
  %v96 = vpack.c.b16 %v88, %v87
  %v97 = vpack.c.b16 %v90, %v89
  %v98 = vpack.c.b16 %v92, %v91
  %v99 = vpack.c.b16 %v94, %v93
  %v100 = vpack.c.b16 %v95, %v95
  %vm105 = vcmask 588800
  %v107 = vsel %vm105, %v18, 0
  %vm109 = vcmask 1043456
  %v111 = vsel %vm109, %v100, 0
  %113 = vmatprep.subr.bf16.mxu0 0
  %114 = vmatpush1.bf16.msra.mxu0 %v96
  %115 = vmatprep.subr.bf16.mxu0 0
  %116 = vmatpush1.bf16.msra.mxu0 %v97
  %117 = vmatprep.subr.bf16.mxu0 0
  %118 = vmatpush1.bf16.msra.mxu0 %v98
  %119 = vmatprep.subr.bf16.mxu0 0
  %120 = vmatpush1.bf16.msra.mxu0 %v99
  %121 = vmatprep.subr.bf16.mxu0 0
  %122 = vmatpush1.bf16.msra.mxu0 %v111
  %123 = vmatprep.subr.bf16.mxu0 0
  %124 = vmatpush1.bf16.msra.mxu0 0
  %125 = vmatprep.subr.bf16.mxu0 0
  %126 = vmatpush1.bf16.msra.mxu0 0
  %127 = vmatprep.subr.bf16.mxu0 0
  %128 = vmatpush1.bf16.msra.mxu0 0
  %129 = vmatprep.subr.bf16.mxu0 0
  %130 = vmatpush1.bf16.msra.mxu0 0
  %131 = vmatprep.subr.bf16.mxu0 0
  %132 = vmatpush1.bf16.msra.mxu0 0
  %133 = vmatprep.subr.bf16.mxu0 0
  %134 = vmatpush1.bf16.msra.mxu0 0
  %135 = vmatprep.subr.bf16.mxu0 0
  %136 = vmatpush1.bf16.msra.mxu0 0
  %137 = vmatprep.subr.bf16.mxu0 0
  %138 = vmatpush1.bf16.msra.mxu0 0
  %139 = vmatprep.subr.bf16.mxu0 0
  %140 = vmatpush1.bf16.msra.mxu0 0
  %141 = vmatprep.subr.bf16.mxu0 0
  %142 = vmatpush1.bf16.msra.mxu0 0
  %143 = vmatprep.subr.bf16.mxu0 0
  %144 = vmatpush1.bf16.msra.mxu0 0
  %145 = vmatprep.mubr.bf16.mxu0 0
  %146 = vmatmul.mubr.bf16.gmra.mrb[0].mxu0 %v107
  %v147 = vpop.f32.mrb[0].mxu0
  %v148 = vadd.f32 %v73, %v147
  %v149 = vpop.f32.mrb[0].mxu0
  %v150 = vpop.f32.mrb[0].mxu0
  %v151 = vpop.f32.mrb[0].mxu0
  %152 = vdwg.mxu0
  %153 = vst [vmem:[%s4] sm:$0xff] %v148
  // Predicated region
  $region18: #{network_block_forward.8} parent=0 // pred_check
    _
  $region19: #{network_block_forward.8} parent=0 // pred_check_branch
    %155 = sbr.rel (0) target = $region21
  $region20: #{network_block_forward.8} parent=0 // pred_region
    _
  $region21: #{network_block_forward.8} parent=0 // pred_fallthru
    _
  // Predicated region
  $region22: #{network_block_forward.8} parent=0 // pred_check
    _
  $region23: #{network_block_forward.8} parent=0 // pred_check_branch
    %157 = sbr.rel (0) target = $region25
  $region24: #{network_block_forward.8} parent=0 // pred_region
    _
  $region25: #{network_block_forward.8} parent=0 // pred_fallthru
    _

// kernel: network_block_forward.10
$region0: #{network_block_forward.10}
  #allocation0 [shape = 'u32[]', space=smem, size = 0x4, offset = 0x4, fixed_abs, tag = 'smem constant byte address 0x4 - core index']
  #allocation1 [shape = 'u32[144,128]{1,0:T(1,128)}', space=vmem, size = 0x12000, scoped, tag = 'internal scratch']
  %s0 = inlined_call_operand.vmem [shape: bf16[8,72], index: 0, kind: input, shape index: {}]
  %s1 = inlined_call_operand.vmem [shape: bf16[72,128], index: 1, kind: input, shape index: {}]
  %s2 = inlined_call_operand.vmem [shape: f32[8,1], index: 2, kind: input, shape index: {}]
  %s3 = inlined_call_operand.vmem [shape: bf16[8,128], index: 3, kind: output, shape index: {}]
  %s4 = sld [smem:[#allocation0]]
  $region22: #{network_block_forward.10} parent=0
    _
  %s6 = ssub.s32 1, %s4
  %s7 = scalar_select 0, %s6, %s4
  // Predicated region
  $region2: #{network_block_forward.10} parent=0 // pred_check
    _
  $region3: #{network_block_forward.10} parent=0 // pred_check_branch
    %9 = sbr.rel (0) target = $region5
  $region4: #{network_block_forward.10} parent=0 // pred_region
    _
  $region5: #{network_block_forward.10} parent=0 // pred_fallthru
    _
  // Predicated region
  $region6: #{network_block_forward.10} parent=0 // pred_check
    _
  $region7: #{network_block_forward.10} parent=0 // pred_check_branch
    %11 = sbr.rel (0) target = $region9
  $region8: #{network_block_forward.10} parent=0 // pred_region
    _
  $region9: #{network_block_forward.10} parent=0 // pred_fallthru
    _
  // Predicated region
  $region10: #{network_block_forward.10} parent=0 // pred_check
    _
  $region11: #{network_block_forward.10} parent=0 // pred_check_branch
    %13 = sbr.rel (0) target = $region13
  $region12: #{network_block_forward.10} parent=0 // pred_region
    _
  $region13: #{network_block_forward.10} parent=0 // pred_fallthru
    _
  %v15 = vld [vmem:[%s0] sm:$0xf]
  %v16 = vld [vmem:[%s1] sm:$0xf]
  %v17 = vld [vmem:[%s1 + $0x4] sm:$0xf]
  %v18 = vld [vmem:[%s1 + $0x8] sm:$0xf]
  %v19 = vld [vmem:[%s1 + $0xc] sm:$0xf]
  %v20 = vld [vmem:[%s1 + $0x10] sm:$0xf]
  %v21 = vld [vmem:[%s1 + $0x14] sm:$0xf]
  %v22 = vld [vmem:[%s1 + $0x18] sm:$0xf]
  %v23 = vld [vmem:[%s1 + $0x1c] sm:$0xf]
  %v24 = vld [vmem:[%s1 + $0x20] sm:$0xf]
  %v25 = vld [vmem:[%s2] sm:$0xff]
  %27 = vset.pattern.permute.xlu0 0
  %28 = vperm.xlu0 %27, %v25
  %v29 = vpop.permute.xlu0 %28
  %v40 = vunpack.c.l.b16 %v16
  %v41 = vunpack.c.l.b16 %v17
  %v42 = vunpack.c.l.b16 %v18
  %v43 = vunpack.c.l.b16 %v19
  %v44 = vunpack.c.l.b16 %v20
  %v45 = vunpack.c.l.b16 %v21
  %v46 = vunpack.c.l.b16 %v22
  %v47 = vunpack.c.l.b16 %v23
  %v48 = vunpack.c.l.b16 %v24
  %v49 = vpack.c.b16 %v41, %v40
  %v50 = vpack.c.b16 %v43, %v42
  %v51 = vpack.c.b16 %v45, %v44
  %v52 = vpack.c.b16 %v47, %v46
  %v53 = vpack.c.b16 %v48, %v48
  %vm58 = vcmask 588800
  %v60 = vsel %vm58, %v15, 0
  %vm62 = vcmask 1043456
  %v64 = vsel %vm62, %v53, 0
  %66 = vmatprep.subr.bf16.mxu0 0
  %67 = vmatpush1.bf16.msra.mxu0 %v49
  %68 = vmatprep.subr.bf16.mxu0 0
  %69 = vmatpush1.bf16.msra.mxu0 %v50
  %70 = vmatprep.subr.bf16.mxu0 0
  %71 = vmatpush1.bf16.msra.mxu0 %v51
  %72 = vmatprep.subr.bf16.mxu0 0
  %73 = vmatpush1.bf16.msra.mxu0 %v52
  %74 = vmatprep.subr.bf16.mxu0 0
  %75 = vmatpush1.bf16.msra.mxu0 %v64
  %76 = vmatprep.subr.bf16.mxu0 0
  %77 = vmatpush1.bf16.msra.mxu0 0
  %78 = vmatprep.subr.bf16.mxu0 0
  %79 = vmatpush1.bf16.msra.mxu0 0
  %80 = vmatprep.subr.bf16.mxu0 0
  %81 = vmatpush1.bf16.msra.mxu0 0
  %82 = vmatprep.subr.bf16.mxu0 0
  %83 = vmatpush1.bf16.msra.mxu0 0
  %84 = vmatprep.subr.bf16.mxu0 0
  %85 = vmatpush1.bf16.msra.mxu0 0
  %86 = vmatprep.subr.bf16.mxu0 0
  %87 = vmatpush1.bf16.msra.mxu0 0
  %88 = vmatprep.subr.bf16.mxu0 0
  %89 = vmatpush1.bf16.msra.mxu0 0
  %90 = vmatprep.subr.bf16.mxu0 0
  %91 = vmatpush1.bf16.msra.mxu0 0
  %92 = vmatprep.subr.bf16.mxu0 0
  %93 = vmatpush1.bf16.msra.mxu0 0
  %94 = vmatprep.subr.bf16.mxu0 0
  %95 = vmatpush1.bf16.msra.mxu0 0
  %96 = vmatprep.subr.bf16.mxu0 0
  %97 = vmatpush1.bf16.msra.mxu0 0
  %98 = vmatprep.mubr.bf16.mxu0 0
  %99 = vmatmul.mubr.bf16.gmra.mrb[0].mxu0 %v60
  %v100 = vpop.f32.mrb[0].mxu0
  %v101 = vadd.f32 %v29, %v100
  %v102 = vpop.f32.mrb[0].mxu0
  %v103 = vpop.f32.mrb[0].mxu0
  %v104 = vpop.f32.mrb[0].mxu0
  %105 = vdwg.mxu0
  %v106 = vmax.f32 %v101, 0.0
  %v107 = vpack.c.bf16 %v106, %v106
  %108 = vst [vmem:[%s3] sm:$0xf] %v107
  // Predicated region
  $region14: #{network_block_forward.10} parent=0 // pred_check
    _
  $region15: #{network_block_forward.10} parent=0 // pred_check_branch
    %110 = sbr.rel (0) target = $region17
  $region16: #{network_block_forward.10} parent=0 // pred_region
    _
  $region17: #{network_block_forward.10} parent=0 // pred_fallthru
    _
  // Predicated region
  $region18: #{network_block_forward.10} parent=0 // pred_check
    _
  $region19: #{network_block_forward.10} parent=0 // pred_check_branch
    %112 = sbr.rel (0) target = $region21
  $region20: #{network_block_forward.10} parent=0 // pred_region
    _
  $region21: #{network_block_forward.10} parent=0 // pred_fallthru
    _

// kernel: network_block_forward.11
$region0: #{network_block_forward.11}
  #allocation0 [shape = 'u32[]', space=smem, size = 0x4, offset = 0x4, fixed_abs, tag = 'smem constant byte address 0x4 - core index']
  #allocation1 [shape = 'u32[144,128]{1,0:T(1,128)}', space=vmem, size = 0x12000, scoped, tag = 'internal scratch']
  %s0 = inlined_call_operand.vmem [shape: bf16[8,72], index: 0, kind: input, shape index: {}]
  %s1 = inlined_call_operand.vmem [shape: bf16[72,128], index: 1, kind: input, shape index: {}]
  %s2 = inlined_call_operand.vmem [shape: f32[8,128], index: 2, kind: input, shape index: {}]
  %s3 = inlined_call_operand.vmem [shape: f32[8,128], index: 3, kind: output, shape index: {}]
  %s4 = sld [smem:[#allocation0]]
  $region22: #{network_block_forward.11} parent=0
    _
  %s6 = ssub.s32 1, %s4
  %s7 = scalar_select 0, %s6, %s4
  // Predicated region
  $region2: #{network_block_forward.11} parent=0 // pred_check
    _
  $region3: #{network_block_forward.11} parent=0 // pred_check_branch
    %9 = sbr.rel (0) target = $region5
  $region4: #{network_block_forward.11} parent=0 // pred_region
    _
  $region5: #{network_block_forward.11} parent=0 // pred_fallthru
    _
  // Predicated region
  $region6: #{network_block_forward.11} parent=0 // pred_check
    _
  $region7: #{network_block_forward.11} parent=0 // pred_check_branch
    %11 = sbr.rel (0) target = $region9
  $region8: #{network_block_forward.11} parent=0 // pred_region
    _
  $region9: #{network_block_forward.11} parent=0 // pred_fallthru
    _
  // Predicated region
  $region10: #{network_block_forward.11} parent=0 // pred_check
    _
  $region11: #{network_block_forward.11} parent=0 // pred_check_branch
    %13 = sbr.rel (0) target = $region13
  $region12: #{network_block_forward.11} parent=0 // pred_region
    _
  $region13: #{network_block_forward.11} parent=0 // pred_fallthru
    _
  %v15 = vld [vmem:[%s0] sm:$0xf]
  %v16 = vld [vmem:[%s1] sm:$0xf]
  %v17 = vld [vmem:[%s1 + $0x4] sm:$0xf]
  %v18 = vld [vmem:[%s1 + $0x8] sm:$0xf]
  %v19 = vld [vmem:[%s1 + $0xc] sm:$0xf]
  %v20 = vld [vmem:[%s1 + $0x10] sm:$0xf]
  %v21 = vld [vmem:[%s1 + $0x14] sm:$0xf]
  %v22 = vld [vmem:[%s1 + $0x18] sm:$0xf]
  %v23 = vld [vmem:[%s1 + $0x1c] sm:$0xf]
  %v24 = vld [vmem:[%s1 + $0x20] sm:$0xf]
  %v25 = vld [vmem:[%s2] sm:$0xff]
  %v35 = vunpack.c.l.b16 %v16
  %v36 = vunpack.c.l.b16 %v17
  %v37 = vunpack.c.l.b16 %v18
  %v38 = vunpack.c.l.b16 %v19
  %v39 = vunpack.c.l.b16 %v20
  %v40 = vunpack.c.l.b16 %v21
  %v41 = vunpack.c.l.b16 %v22
  %v42 = vunpack.c.l.b16 %v23
  %v43 = vunpack.c.l.b16 %v24
  %v44 = vpack.c.b16 %v36, %v35
  %v45 = vpack.c.b16 %v38, %v37
  %v46 = vpack.c.b16 %v40, %v39
  %v47 = vpack.c.b16 %v42, %v41
  %v48 = vpack.c.b16 %v43, %v43
  %vm53 = vcmask 588800
  %v55 = vsel %vm53, %v15, 0
  %vm57 = vcmask 1043456
  %v59 = vsel %vm57, %v48, 0
  %61 = vmatprep.subr.bf16.mxu0 0
  %62 = vmatpush1.bf16.msra.mxu0 %v44
  %63 = vmatprep.subr.bf16.mxu0 0
  %64 = vmatpush1.bf16.msra.mxu0 %v45
  %65 = vmatprep.subr.bf16.mxu0 0
  %66 = vmatpush1.bf16.msra.mxu0 %v46
  %67 = vmatprep.subr.bf16.mxu0 0
  %68 = vmatpush1.bf16.msra.mxu0 %v47
  %69 = vmatprep.subr.bf16.mxu0 0
  %70 = vmatpush1.bf16.msra.mxu0 %v59
  %71 = vmatprep.subr.bf16.mxu0 0
  %72 = vmatpush1.bf16.msra.mxu0 0
  %73 = vmatprep.subr.bf16.mxu0 0
  %74 = vmatpush1.bf16.msra.mxu0 0
  %75 = vmatprep.subr.bf16.mxu0 0
  %76 = vmatpush1.bf16.msra.mxu0 0
  %77 = vmatprep.subr.bf16.mxu0 0
  %78 = vmatpush1.bf16.msra.mxu0 0
  %79 = vmatprep.subr.bf16.mxu0 0
  %80 = vmatpush1.bf16.msra.mxu0 0
  %81 = vmatprep.subr.bf16.mxu0 0
  %82 = vmatpush1.bf16.msra.mxu0 0
  %83 = vmatprep.subr.bf16.mxu0 0
  %84 = vmatpush1.bf16.msra.mxu0 0
  %85 = vmatprep.subr.bf16.mxu0 0
  %86 = vmatpush1.bf16.msra.mxu0 0
  %87 = vmatprep.subr.bf16.mxu0 0
  %88 = vmatpush1.bf16.msra.mxu0 0
  %89 = vmatprep.subr.bf16.mxu0 0
  %90 = vmatpush1.bf16.msra.mxu0 0
  %91 = vmatprep.subr.bf16.mxu0 0
  %92 = vmatpush1.bf16.msra.mxu0 0
  %93 = vmatprep.mubr.bf16.mxu0 0
  %94 = vmatmul.mubr.bf16.gmra.mrb[0].mxu0 %v55
  %v95 = vpop.f32.mrb[0].mxu0
  %v96 = vadd.f32 %v25, %v95
  %v97 = vpop.f32.mrb[0].mxu0
  %v98 = vpop.f32.mrb[0].mxu0
  %v99 = vpop.f32.mrb[0].mxu0
  %100 = vdwg.mxu0
  %101 = vst [vmem:[%s3] sm:$0xff] %v96
  // Predicated region
  $region14: #{network_block_forward.11} parent=0 // pred_check
    _
  $region15: #{network_block_forward.11} parent=0 // pred_check_branch
    %103 = sbr.rel (0) target = $region17
  $region16: #{network_block_forward.11} parent=0 // pred_region
    _
  $region17: #{network_block_forward.11} parent=0 // pred_fallthru
    _
  // Predicated region
  $region18: #{network_block_forward.11} parent=0 // pred_check
    _
  $region19: #{network_block_forward.11} parent=0 // pred_check_branch
    %105 = sbr.rel (0) target = $region21
  $region20: #{network_block_forward.11} parent=0 // pred_region
    _
  $region21: #{network_block_forward.11} parent=0 // pred_fallthru
    _

</llo_original>
